<compile_context>
chip_gen: v5e
topology: v5e:2x2
jax: 0.10.0
libtpu: 0.0.40
codegen_flags: <defaults>
</compile_context>

<pallas_src>
import jax
import jax.numpy as jnp
import numpy as np
from jax.experimental import pallas as pl
from jax.experimental.pallas import tpu as pltpu


def head_kernel(x_ref, wqkv_ref, o_ref):
    # x_ref: (B, T, C); wqkv_ref: (C, 3H) = [Wq | Wk | Wv]; o_ref: (B, T, H)
    B, T, C = x_ref.shape
    H = o_ref.shape[-1]

    x2d = x_ref[...].reshape(B * T, C)                  # fold batch into rows
    wqkv = wqkv_ref[...]

    # Single fused QKV projection: (B*T, C) @ (C, 3H) -> (B*T, 3H)
    qkv = jnp.dot(x2d, wqkv, preferred_element_type=jnp.float32)

    scale = jnp.float32(H) ** jnp.float32(-0.5)
    q = (qkv[:, 0 * H:1 * H] * scale).reshape(B, T, H)  # scale folded into q
    k = qkv[:, 1 * H:2 * H].reshape(B, T, H)
    v = qkv[:, 2 * H:3 * H].reshape(B, T, H)

    # Scores (B, T, T): contract on the last dim of both operands (no k.T).
    wei = jnp.einsum('btd,bsd->bts', q, k, preferred_element_type=jnp.float32)

    # Causal mask built in-kernel: keep where row >= col (lower triangle).
    row = jax.lax.broadcasted_iota(jnp.int32, (T, T), 0)
    col = jax.lax.broadcasted_iota(jnp.int32, (T, T), 1)
    causal = (row >= col)[None, :, :]                    # (1, T, T)
    wei = jnp.where(causal, wei, jnp.float32(-jnp.inf))

    # Softmax over dim=1 of (B, T, T) -- the query axis, as in the reference.
    # Every column s has its diagonal entry unmasked, so m is finite and
    # denom > 0; exp(-inf - m) cleanly produces 0 for masked entries.
    m = jnp.max(wei, axis=1, keepdims=True)              # (B, 1, T)
    e = jnp.exp(wei - m)                                 # masked entries -> 0
    denom = jnp.sum(e, axis=1, keepdims=True)            # (B, 1, T)
    wei = e / denom

    # out = wei @ v  (batched)
    out = jnp.einsum('bts,bsh->bth', wei, v, preferred_element_type=jnp.float32)
    o_ref[...] = out.astype(o_ref.dtype)


def head_forward(x, wq, wk, wv):
    B, T, C = x.shape
    H = wq.shape[1]
    # Fuse the three projection weights into one (C, 3H) slab (done once, in JAX).
    wqkv = jnp.concatenate([wq, wk, wv], axis=1)
    # Problem is tiny (a few KB): no grid, single invocation, everything in VMEM.
    return pl.pallas_call(
        head_kernel,
        out_shape=jax.ShapeDtypeStruct((B, T, H), jnp.float32),
        in_specs=[
            pl.BlockSpec(memory_space=pltpu.MemorySpace.VMEM),   # x (B,T,C)
            pl.BlockSpec(memory_space=pltpu.MemorySpace.VMEM),   # Wqkv (C,3H)
        ],
        out_specs=pl.BlockSpec(memory_space=pltpu.MemorySpace.VMEM),
    )(x, wqkv)


def head_reference(x, wq, wk, wv, tril):
    # Pure-JAX reference mirroring the PyTorch forward exactly.
    q = x @ wq
    k = x @ wk
    v = x @ wv
    H = wq.shape[1]
    wei = jnp.einsum("btd,bsd->bts", q, k)
    wei = jnp.where(tril[None] == 0.0, -jnp.inf, wei)
    wei = wei * H ** (-0.5)
    wei = jax.nn.softmax(wei, axis=1)          # dim=1, as in the reference
    return jnp.einsum("bts,bsh->bth", wei, v)


if __name__ == "__main__":
    # Small shapes consistent with the module
    B, T, C, H = 2, 8, 32, 16      # batch, seq(context_len), n_emb, head_size
    key = jax.random.PRNGKey(0)
    kx, kq, kk, kv = jax.random.split(key, 4)

    x = jax.random.normal(kx, (B, T, C), dtype=jnp.float32)
    # deterministic parameter init (kaiming-uniform-like scale, fixed seed)
    bound = 1.0 / np.sqrt(C)
    wq = jax.random.uniform(kq, (C, H), jnp.float32, -bound, bound)
    wk = jax.random.uniform(kk, (C, H), jnp.float32, -bound, bound)
    wv = jax.random.uniform(kv, (C, H), jnp.float32, -bound, bound)
    tril = jnp.tril(jnp.ones((T, T), dtype=jnp.float32))

    out = head_forward(x, wq, wk, wv)
    out = jax.block_until_ready(out)

    ref = head_reference(x, wq, wk, wv, tril)
    np.testing.assert_allclose(np.asarray(out), np.asarray(ref),
                               rtol=1e-5, atol=1e-5)
    print("KERNEL_OK")
</pallas_src>

<mosaic_0001>
module attributes {stable_mosaic.version = 11 : i64} {
  func.func @head_kernel(%arg0: memref<2x8x32xf32, #tpu.memory_space<vmem>>, %arg1: memref<32x48xf32, #tpu.memory_space<vmem>>, %arg2: memref<2x8x16xf32, #tpu.memory_space<vmem>>) attributes {dimension_semantics = [], scalar_prefetch = 0 : i64, scratch_operands = 0 : i64, tpu.core_type = #tpu.core_type<tc>} {
    %c0 = arith.constant 0 : index
    %c0_0 = arith.constant 0 : index
    %c0_1 = arith.constant 0 : index
    %0 = vector.load %arg0[%c0, %c0_0, %c0_1] : memref<2x8x32xf32, #tpu.memory_space<vmem>>, vector<2x8x32xf32>
    %1 = vector.shape_cast %0 : vector<2x8x32xf32> to vector<16x32xf32>
    %c0_2 = arith.constant 0 : index
    %c0_3 = arith.constant 0 : index
    %2 = vector.load %arg1[%c0_2, %c0_3] : memref<32x48xf32, #tpu.memory_space<vmem>>, vector<32x48xf32>
    %cst = arith.constant dense<0.000000e+00> : vector<16x48xf32>
    %3 = tpu.matmul %1, %2, %cst {dimension_numbers = #tpu.dot_dimension_numbers<[1], [0], [0], [1], [0, 0, 1, 1], [], []>} : vector<16x32xf32>, vector<32x48xf32>, vector<16x48xf32> -> vector<16x48xf32>
    %cst_4 = arith.constant 1.600000e+01 : f32
    %cst_5 = arith.constant -5.000000e-01 : f32
    %4 = math.powf %cst_4, %cst_5 : f32
    %5 = vector.extract_strided_slice %3 {offsets = [0, 0], sizes = [16, 16], strides = [1, 1]} : vector<16x48xf32> to vector<16x16xf32>
    %6 = vector.broadcast %4 : f32 to vector<16x16xf32>
    %7 = arith.mulf %5, %6 : vector<16x16xf32>
    %8 = vector.shape_cast %7 : vector<16x16xf32> to vector<2x8x16xf32>
    %9 = vector.extract_strided_slice %3 {offsets = [0, 16], sizes = [16, 16], strides = [1, 1]} : vector<16x48xf32> to vector<16x16xf32>
    %10 = vector.shape_cast %9 : vector<16x16xf32> to vector<2x8x16xf32>
    %11 = vector.extract_strided_slice %3 {offsets = [0, 32], sizes = [16, 16], strides = [1, 1]} : vector<16x48xf32> to vector<16x16xf32>
    %12 = vector.shape_cast %11 : vector<16x16xf32> to vector<2x8x16xf32>
    "tpu.trace_start"() <{level = 10 : i32, message = "btd,bsd->bts"}> : () -> ()
    %cst_6 = arith.constant dense<0.000000e+00> : vector<2x8x8xf32>
    %13 = tpu.matmul %8, %10, %cst_6 {dimension_numbers = #tpu.dot_dimension_numbers<[2], [2], [1], [1], [0, 0, 0, 1, 1, 1], [0], [0]>} : vector<2x8x16xf32>, vector<2x8x16xf32>, vector<2x8x8xf32> -> vector<2x8x8xf32>
    "tpu.trace_stop"() : () -> ()
    %14 = tpu.iota {dimensions = array<i32: 0>} : vector<8x8xi32>
    %15 = tpu.iota {dimensions = array<i32: 1>} : vector<8x8xi32>
    %16 = arith.cmpi sge, %14, %15 : vector<8x8xi32>
    %17 = vector.shape_cast %16 : vector<8x8xi1> to vector<1x8x8xi1>
    %cst_7 = arith.constant 0xFF800000 : f32
    %18 = vector.shape_cast %17 : vector<1x8x8xi1> to vector<1x8x8xi1>
    %19 = vector.broadcast %18 : vector<1x8x8xi1> to vector<2x8x8xi1>
    %20 = vector.broadcast %cst_7 : f32 to vector<2x8x8xf32>
    %21 = arith.select %19, %13, %20 : vector<2x8x8xi1>, vector<2x8x8xf32>
    %cst_8 = arith.constant dense<0xFF800000> : vector<2x8xf32>
    %22 = vector.multi_reduction <maximumf>, %21, %cst_8 [1] : vector<2x8x8xf32> to vector<2x8xf32>
    %23 = vector.shape_cast %22 : vector<2x8xf32> to vector<2x1x8xf32>
    %24 = vector.broadcast %23 : vector<2x1x8xf32> to vector<2x8x8xf32>
    %25 = arith.subf %21, %24 : vector<2x8x8xf32>
    %26 = math.exp %25 : vector<2x8x8xf32>
    %cst_9 = arith.constant dense<0.000000e+00> : vector<2x8xf32>
    %27 = vector.multi_reduction <add>, %26, %cst_9 [1] : vector<2x8x8xf32> to vector<2x8xf32>
    %28 = vector.shape_cast %27 : vector<2x8xf32> to vector<2x1x8xf32>
    %29 = vector.broadcast %28 : vector<2x1x8xf32> to vector<2x8x8xf32>
    %30 = arith.divf %26, %29 : vector<2x8x8xf32>
    "tpu.trace_start"() <{level = 10 : i32, message = "bts,bsh->bth"}> : () -> ()
    %cst_10 = arith.constant dense<0.000000e+00> : vector<2x8x16xf32>
    %31 = tpu.matmul %30, %12, %cst_10 {dimension_numbers = #tpu.dot_dimension_numbers<[2], [1], [1], [2], [0, 0, 0, 1, 1, 2], [0], [0]>} : vector<2x8x8xf32>, vector<2x8x16xf32>, vector<2x8x16xf32> -> vector<2x8x16xf32>
    "tpu.trace_stop"() : () -> ()
    %c0_11 = arith.constant 0 : index
    %c0_12 = arith.constant 0 : index
    %c0_13 = arith.constant 0 : index
    %32 = vector.load %arg2[%c0_11, %c0_12, %c0_13] : memref<2x8x16xf32, #tpu.memory_space<vmem>>, vector<2x8x16xf32>
    tpu.vector_store %arg2[%c0_11, %c0_12, %c0_13], %31 {strides = array<i32>} : memref<2x8x16xf32, #tpu.memory_space<vmem>>, vector<2x8x16xf32>,
    return
  }
}

</mosaic_0001>

<llo_original>
// kernel: tpu_custom_call.1
$region0: #{tpu_custom_call.1}
  #allocation0 [shape = 'u32[]', space=smem, size = 0x4, offset = 0x4, fixed_abs, tag = 'smem constant byte address 0x4 - core index']
  #allocation1 [shape = 'u32[72,128]{1,0:T(1,128)}', space=vmem, size = 0x9000, scoped, tag = 'internal scratch']
  %s0 = inlined_call_operand.hbm [shape: f32[2,8,32], index: 0, kind: input, shape index: {}]
  %s1 = inlined_call_operand.hbm [shape: f32[32,48], index: 1, kind: input, shape index: {}]
  %s2 = inlined_call_operand.hbm [shape: f32[2,8,16], index: 2, kind: output, shape index: {}]
  %s3 = sld [smem:[#allocation0]]
  $region26: #{tpu_custom_call.1} parent=0
    _
  %s5 = ssub.s32 1, %s3
  %s6 = scalar_select 0, %s5, %s3
  $region1: #{tpu_custom_call.1} parent=0
    #allocation2 [shape = 'u8[8192]{0}', space=vmem, size = 0x2000, scoped, tag = 'input window, operand 0, single buffered']
    #allocation3 [shape = 's32[1]{0}', space=sflag, size = 0x4, scoped, tag = 'scoped memory for tpu_custom_call.1']
    #allocation4 [shape = 's32[1]{0}', space=sflag, size = 0x4, scoped, tag = 'scoped memory for tpu_custom_call.1']
    #allocation5 [shape = 'u8[16384]{0}', space=vmem, size = 0x4000, scoped, tag = 'input window, operand 1, single buffered']
    #allocation6 [shape = 's32[1]{0}', space=sflag, size = 0x4, scoped, tag = 'scoped memory for tpu_custom_call.1']
    #allocation7 [shape = 'u8[8192]{0}', space=vmem, size = 0x2000, scoped, tag = 'output window, operand 0, single buffered']
    %7 = vsyncpa [#allocation3], 0
    %8 = vsyncpa [#allocation6], 0
    %9 = vsyncpa [#allocation4], 0
    // Predicated region
    $region2: #{tpu_custom_call.1} parent=1 // pred_check
      _
    $region3: #{tpu_custom_call.1} parent=1 // pred_check_branch
      %11 = sbr.rel (0) target = $region5
    $region4: #{tpu_custom_call.1} parent=1 // pred_region
      %13 = vsyncadd [#allocation3], 0
      %s14 = sshll.u32 %s0, 4
      %s15 = int_to_ptr.hbm [resolvable:$true] %s14
      %s16 = sshll.u32 [#allocation2], 4
      %s17 = int_to_ptr.vmem [resolvable:$true] %s16
      %22 = dma.hbm_to_vmem [thread:$0]  %s15, 256, %s17, [#allocation3], 128, 128, 8
    $region5: #{tpu_custom_call.1} parent=1 // pred_fallthru
      _
    // Predicated region
    $region6: #{tpu_custom_call.1} parent=1 // pred_check
      _
    $region7: #{tpu_custom_call.1} parent=1 // pred_check_branch
      %24 = sbr.rel (0) target = $region9
    $region8: #{tpu_custom_call.1} parent=1 // pred_region
      %26 = vsyncadd [#allocation6], 0
      %s27 = sshll.u32 %s1, 4
      %s28 = int_to_ptr.hbm [resolvable:$true] %s27
      %s29 = sshll.u32 [#allocation5], 4
      %s30 = int_to_ptr.vmem [resolvable:$true] %s29
      %35 = dma.hbm_to_vmem [thread:$0]  %s28, 512, %s30, [#allocation6], 128, 128, 8
    $region9: #{tpu_custom_call.1} parent=1 // pred_fallthru
      _
    // Predicated region
    $region10: #{tpu_custom_call.1} parent=1 // pred_check
      _
    $region11: #{tpu_custom_call.1} parent=1 // pred_check_branch
      %37 = sbr.rel (0) target = $region13
    $region12: #{tpu_custom_call.1} parent=1 // pred_region
      %39 = dma.done [#allocation3], 256
    $region13: #{tpu_custom_call.1} parent=1 // pred_fallthru
      _
    // Predicated region
    $region14: #{tpu_custom_call.1} parent=1 // pred_check
      _
    $region15: #{tpu_custom_call.1} parent=1 // pred_check_branch
      %41 = sbr.rel (0) target = $region17
    $region16: #{tpu_custom_call.1} parent=1 // pred_region
      %43 = dma.done [#allocation6], 512
    $region17: #{tpu_custom_call.1} parent=1 // pred_fallthru
      _
    %v44 = vld [vmem:[#allocation2] sm:$0xff]
    %v45 = vld [vmem:[#allocation2 + $0x8] sm:$0xff]
    %v46 = vld [vmem:[#allocation5] sm:$0xff]
    %v47 = vld [vmem:[#allocation5 + $0x8] sm:$0xff]
    %v48 = vld [vmem:[#allocation5 + $0x10] sm:$0xff]
    %v49 = vld [vmem:[#allocation5 + $0x18] sm:$0xff]
    %vm50 = vcmask 261120
    %v52 = vsel %vm50, %v44, 0
    %v55 = vsel %vm50, %v45, 0
    %57 = vmatpush.msra.mxu0 0.0
    %58 = vmatpush.msra.mxu0 0.0
    %59 = vmatpush.msra.mxu0 0.0
    %60 = vmatpush.msra.mxu0 0.0
    %61 = vmatpush.msra.mxu0 0.0
    %62 = vmatpush.msra.mxu0 0.0
    %63 = vmatpush.msra.mxu0 0.0
    %64 = vmatpush.msra.mxu0 0.0
    %65 = vmatpush.msra.mxu0 0.0
    %66 = vmatpush.msra.mxu0 0.0
    %67 = vmatpush.msra.mxu0 0.0
    %68 = vmatpush.msra.mxu0 0.0
    %69 = vmatpush.msra.mxu0 %v49
    %70 = vmatpush.msra.mxu0 %v48
    %71 = vmatpush.msra.mxu0 %v47
    %72 = vmatpush.msra.mxu0 %v46
    %73 = vmatmul.f32.gmra.mxu0 %v52
    %v74 = vpop.f32.mrf.mxu0
    %v75 = vadd.f32 0.0, %v74
    %76 = vmatmul.f32.gmra.mxu0 %v55
    %v77 = vpop.f32.mrf.mxu0
    %v78 = vadd.f32 0.0, %v77
    %79 = vdwg.mxu0
    %v80 = vmul.f32 %v75, 0.25
    %v81 = vmul.f32 %v78, 0.25
    %83 = vrot.lane.b32.xlu0 %v75, 112
    %v84 = vpop.permute.xlu0 %83
    %vm85 = vcmask 130048
    %v87 = vsel %vm85, %v80, 0
    %v89 = vsel %vm85, %v84, 0
    %91 = vmatpush.xpose.msra.mxu0 0.0
    %92 = vmatpush.xpose.msra.mxu0 0.0
    %93 = vmatpush.xpose.msra.mxu0 0.0
    %94 = vmatpush.xpose.msra.mxu0 0.0
    %95 = vmatpush.xpose.msra.mxu0 0.0
    %96 = vmatpush.xpose.msra.mxu0 0.0
    %97 = vmatpush.xpose.msra.mxu0 0.0
    %98 = vmatpush.xpose.msra.mxu0 0.0
    %99 = vmatpush.xpose.msra.mxu0 0.0
    %100 = vmatpush.xpose.msra.mxu0 0.0
    %101 = vmatpush.xpose.msra.mxu0 0.0
    %102 = vmatpush.xpose.msra.mxu0 0.0
    %103 = vmatpush.xpose.msra.mxu0 0.0
    %104 = vmatpush.xpose.msra.mxu0 0.0
    %105 = vmatpush.xpose.msra.mxu0 0.0
    %106 = vmatpush.xpose.msra.mxu0 %v89
    %107 = vmatmul.f32.gmra.mxu0 %v87
    %v108 = vpop.f32.mrf.mxu0
    %v109 = vadd.f32 0.0, %v108
    %110 = vdwg.mxu0
    %112 = vrot.lane.b32.xlu0 %v78, 112
    %v113 = vpop.permute.xlu0 %112
    %v115 = vsel %vm85, %v81, 0
    %v117 = vsel %vm85, %v113, 0
    %119 = vmatpush.xpose.msra.mxu0 0.0
    %120 = vmatpush.xpose.msra.mxu0 0.0
    %121 = vmatpush.xpose.msra.mxu0 0.0
    %122 = vmatpush.xpose.msra.mxu0 0.0
    %123 = vmatpush.xpose.msra.mxu0 0.0
    %124 = vmatpush.xpose.msra.mxu0 0.0
    %125 = vmatpush.xpose.msra.mxu0 0.0
    %126 = vmatpush.xpose.msra.mxu0 0.0
    %127 = vmatpush.xpose.msra.mxu0 0.0
    %128 = vmatpush.xpose.msra.mxu0 0.0
    %129 = vmatpush.xpose.msra.mxu0 0.0
    %130 = vmatpush.xpose.msra.mxu0 0.0
    %131 = vmatpush.xpose.msra.mxu0 0.0
    %132 = vmatpush.xpose.msra.mxu0 0.0
    %133 = vmatpush.xpose.msra.mxu0 0.0
    %134 = vmatpush.xpose.msra.mxu0 %v117
    %135 = vmatmul.f32.gmra.mxu0 %v115
    %v136 = vpop.f32.mrf.mxu0
    %v137 = vadd.f32 0.0, %v136
    %138 = vdwg.mxu0
    %v139 = vlaneseq
    %v140 = vshrl.u32 %v139, 7
    %v141 = vlaneseq
    %v142 = vand.u32 %v141, 127
    %vm143 = vcmp.ge.s32.totalorder %v140, %v142
    %v144 = vsel %vm143, 1, 0
    %vm145 = vcmp.eq.s32.totalorder %v144, 1
    %v146 = vsel %vm145, %v109, -inf
    %v147 = vsel %vm145, %v137, -inf
    %vm148 = vcmask 64512
    %v149 = vsel %vm148, %v146, -inf
    %v150 = vrot.slane %v149, 4
    %v151 = vmax.f32 %v149, %v150
    %v152 = vrot.slane %v151, 2
    %v153 = vmax.f32 %v151, %v152
    %v154 = vrot.slane %v153, 1
    %v155 = vmax.f32 %v153, %v154
    %v156 = vsel %vm148, %v147, -inf
    %v157 = vrot.slane %v156, 4
    %v158 = vmax.f32 %v156, %v157
    %v159 = vrot.slane %v158, 2
    %v160 = vmax.f32 %v158, %v159
    %v161 = vrot.slane %v160, 1
    %v162 = vmax.f32 %v160, %v161
    %v163 = vsub.f32 %v146, %v155
    %v164 = vsub.f32 %v147, %v162
    %v165 = vmul.f32 %v163, 1.442695
    %v166 = vpow.pop %v165
    %v167 = vmul.f32 %v164, 1.442695
    %v168 = vpow.pop %v167
    %v169 = vsel %vm148, %v166, 0.0
    %v170 = vrot.slane %v169, 4
    %v171 = vadd.f32 %v169, %v170
    %v172 = vrot.slane %v171, 2
    %v173 = vadd.f32 %v171, %v172
    %v174 = vrot.slane %v173, 1
    %v175 = vadd.f32 %v173, %v174
    %v176 = vsel %vm148, %v168, 0.0
    %v177 = vrot.slane %v176, 4
    %v178 = vadd.f32 %v176, %v177
    %v179 = vrot.slane %v178, 2
    %v180 = vadd.f32 %v178, %v179
    %v181 = vrot.slane %v180, 1
    %v182 = vadd.f32 %v180, %v181
    %v183 = vrcp.pop %v175
    %v184 = vmul.f32 %v175, %v183
    %v185 = vsub.f32 1.0, %v184
    %v186 = vmul.f32 %v183, %v185
    %v187 = vadd.f32 %v183, %v186
    %vm188 = vweird.f32 %v175
    %vm189 = vweird.f32 %v183
    %vm190 = vmor %vm188, %vm189
    %v191 = vsel %vm190, %v183, %v187
    %v192 = vand.u32 2147483647, %v175
    %vm193 = vcmp.eq.f32.partialorder %v192, 8.507059e+37
    %v194 = vand.u32 %v175, 2147483648
    %v195 = vor.u32 1.1754944e-38, %v194
    %v196 = vsel %vm193, %v195, %v191
    %v197 = vmul.f32 %v166, %v196
    %v198 = vrcp.pop %v182
    %v199 = vmul.f32 %v182, %v198
    %v200 = vsub.f32 1.0, %v199
    %v201 = vmul.f32 %v198, %v200
    %v202 = vadd.f32 %v198, %v201
    %vm203 = vweird.f32 %v182
    %vm204 = vweird.f32 %v198
    %vm205 = vmor %vm203, %vm204
    %v206 = vsel %vm205, %v198, %v202
    %v207 = vand.u32 2147483647, %v182
    %vm208 = vcmp.eq.f32.partialorder %v207, 8.507059e+37
    %v209 = vand.u32 %v182, 2147483648
    %v210 = vor.u32 1.1754944e-38, %v209
    %v211 = vsel %vm208, %v210, %v206
    %v212 = vmul.f32 %v168, %v211
    %213 = vrot.lane.b32.xlu0 %v75, 96
    %v214 = vpop.permute.xlu0 %213
    %v217 = vsel %vm148, %v197, 0
    %219 = vmatpush.msra.mxu0 0.0
    %220 = vmatpush.msra.mxu0 0.0
    %221 = vmatpush.msra.mxu0 0.0
    %222 = vmatpush.msra.mxu0 0.0
    %223 = vmatpush.msra.mxu0 0.0
    %224 = vmatpush.msra.mxu0 0.0
    %225 = vmatpush.msra.mxu0 0.0
    %226 = vmatpush.msra.mxu0 0.0
    %227 = vmatpush.msra.mxu0 0.0
    %228 = vmatpush.msra.mxu0 0.0
    %229 = vmatpush.msra.mxu0 0.0
    %230 = vmatpush.msra.mxu0 0.0
    %231 = vmatpush.msra.mxu0 0.0
    %232 = vmatpush.msra.mxu0 0.0
    %233 = vmatpush.msra.mxu0 0.0
    %234 = vmatpush.msra.mxu0 %v214
    %235 = vmatmul.f32.gmra.mxu0 %v217
    %v236 = vpop.f32.mrf.mxu0
    %v237 = vadd.f32 0.0, %v236
    %238 = vdwg.mxu0
    %239 = vrot.lane.b32.xlu0 %v78, 96
    %v240 = vpop.permute.xlu0 %239
    %v243 = vsel %vm148, %v212, 0
    %245 = vmatpush.msra.mxu0 0.0
    %246 = vmatpush.msra.mxu0 0.0
    %247 = vmatpush.msra.mxu0 0.0
    %248 = vmatpush.msra.mxu0 0.0
    %249 = vmatpush.msra.mxu0 0.0
    %250 = vmatpush.msra.mxu0 0.0
    %251 = vmatpush.msra.mxu0 0.0
    %252 = vmatpush.msra.mxu0 0.0
    %253 = vmatpush.msra.mxu0 0.0
    %254 = vmatpush.msra.mxu0 0.0
    %255 = vmatpush.msra.mxu0 0.0
    %256 = vmatpush.msra.mxu0 0.0
    %257 = vmatpush.msra.mxu0 0.0
    %258 = vmatpush.msra.mxu0 0.0
    %259 = vmatpush.msra.mxu0 0.0
    %260 = vmatpush.msra.mxu0 %v240
    %261 = vmatmul.f32.gmra.mxu0 %v243
    %v262 = vpop.f32.mrf.mxu0
    %v263 = vadd.f32 0.0, %v262
    %264 = vdwg.mxu0
    %265 = vst.msk [vmem:[#allocation7] sm:$0xff] %vm85, %v237
    %266 = vst.msk [vmem:[#allocation7 + $0x8] sm:$0xff] %vm85, %v263
    // Predicated region
    $region18: #{tpu_custom_call.1} parent=1 // pred_check
      _
    $region19: #{tpu_custom_call.1} parent=1 // pred_check_branch
      %268 = sbr.rel (0) target = $region21
    $region20: #{tpu_custom_call.1} parent=1 // pred_region
      %270 = vsyncadd [#allocation4], 0
      %s271 = sshll.u32 [#allocation7], 4
      %s272 = int_to_ptr.vmem [resolvable:$true] %s271
      %s273 = sshll.u32 %s2, 4
      %s274 = int_to_ptr.hbm [resolvable:$true] %s273
      %279 = dma.vmem_to_hbm [thread:$0]  %s272, 256, %s274, [#allocation4], 128, 128, 8
    $region21: #{tpu_custom_call.1} parent=1 // pred_fallthru
      _
    // Predicated region
    $region22: #{tpu_custom_call.1} parent=1 // pred_check
      _
    $region23: #{tpu_custom_call.1} parent=1 // pred_check_branch
      %281 = sbr.rel (0) target = $region25
    $region24: #{tpu_custom_call.1} parent=1 // pred_region
      %283 = dma.done [#allocation4], 256
    $region25: #{tpu_custom_call.1} parent=1 // pred_fallthru
      _
    %284 = vsyncpa [#allocation3], 1
    %285 = vsyncpa [#allocation6], 1
    %286 = vsyncpa [#allocation4], 1

</llo_original>
